<compile_context>
chip_gen: v6e
topology: v6e:2x2x1
jax: 0.10.0
libtpu: 0.0.40
codegen_flags: <defaults>
</compile_context>

<pallas_src>
import jax
import jax.numpy as jnp
from jax.experimental import pallas as pl
from jax.experimental.pallas import tpu as pltpu


def _round_up(v, m):
    return ((v + m - 1) // m) * m


# ----------------------------------------------------------------------------
# Fused kernel: (1x1 conv -> ReLU -> global avg pool) -> fc1 -> ReLU -> fc2
#               -> sigmoid, for one batch tile per grid step.
# ----------------------------------------------------------------------------
def fused_kernel(x_ref, cw_ref, cb_ref, w1_ref, b1_ref, w2_ref, b2_ref,
                 o_ref, feats_ref):
    # x_ref:  (BT, C, HW) f32       cw_ref: (F, C) f32      cb_ref: (F, 1) f32
    # w1_ref: (F, 256) bf16         b1_ref: (1, 256) f32
    # w2_ref: (256, OP) bf16        b2_ref: (1, OP) f32
    # o_ref:  (BT, OP) f32          feats_ref: (BT, F) f32 VMEM scratch
    bt, c_in, hw = x_ref.shape
    f_out = cw_ref.shape[0]
    rb = 8 if bt % 8 == 0 else bt          # rows per sub-block (sublane-dense)
    nsb = bt // rb
    inv_hw = 1.0 / hw

    # Tiny conv weights stay resident; hoist the per-channel column views so
    # the broadcasts are not re-materialized inside the loop.
    cw = cw_ref[...]                                   # (F, C) f32
    cb = cb_ref[...]                                   # (F, 1) f32
    cw_cols = [cw[:, c:c + 1] for c in range(c_in)]    # C x (F, 1)

    # ---- Backbone: 1x1 conv -> ReLU -> global average pool ----------------
    # C is tiny (3-4): the conv runs on the VPU as C broadcast multiply-adds
    # per row (an MXU dot would pad the contraction to 128/256 depth).  The
    # per-row (F, HW) f32 intermediate is only ~8 vregs; pooled rows are
    # collected in registers and stored to the scratch once per sub-block.
    def conv_pool_block(base):
        xb = x_ref[pl.ds(base, rb), :, :]              # (rb, C, HW) f32
        pooled = []
        for r in range(rb):                            # static unroll, rb <= 8
            xr = xb[r]                                 # (C, HW)
            z = cw_cols[0] * xr[0][None, :]            # (F, 1)*(1, HW) -> (F, HW)
            for c in range(1, c_in):
                z = z + cw_cols[c] * xr[c][None, :]
            z = jnp.maximum(z + cb, 0.0)               # bias + ReLU
            pooled.append((jnp.sum(z, axis=-1) * inv_hw)[None, :])   # (1, F)
        feats_ref[pl.ds(base, rb), :] = jnp.concatenate(pooled, axis=0)

    if nsb == 1:
        conv_pool_block(0)
    else:
        @pl.loop(0, nsb)
        def _(i):
            conv_pool_block(pl.multiple_of(i * rb, rb))

    # ---- Head: fc1 -> ReLU -> fc2 -> sigmoid (bf16 inputs, f32 accumulate) --
    feats = feats_ref[...].astype(jnp.bfloat16)                      # (BT, F)
    h = jnp.dot(feats, w1_ref[...],
                preferred_element_type=jnp.float32) + b1_ref[...]    # (BT, 256)
    h = jnp.maximum(h, 0.0).astype(jnp.bfloat16)
    y = jnp.dot(h, w2_ref[...],
                preferred_element_type=jnp.float32) + b2_ref[...]    # (BT, OP)
    # Exact sigmoid (true divide; EUP exp + divide are off the VALU critical path).
    o_ref[...] = (1.0 / (1.0 + jnp.exp(-y))).astype(o_ref.dtype)


def finetune_forward(x_nchw, params, *, batch_tile=None):
    """x_nchw: (B, C, H, W) float32 -> (B, output_dim) float32."""
    B, C, H, W = x_nchw.shape
    HW = H * W
    F = params["conv_w"].shape[0]
    H1 = params["fc1_w"].shape[1]
    O = params["fc2_w"].shape[1]
    OP = _round_up(O, 128)      # lane-dense padded output dim (exactly 128-multiple)

    # Batch tile: one full block for tiny B; otherwise a multiple of 8, capped
    # at 128 rows/step, picked so large B still yields >=2 grid steps (both
    # v7x TensorCores busy on the "parallel" axis).  On v5e/v6e (1 TC) the
    # fewer, bigger steps simply amortize the ~600-cycle per-step overhead.
    if batch_tile is None:
        BT = B if B <= 8 else min(_round_up(pl.cdiv(B, 2), 8), 128)
    else:
        BT = max(1, min(batch_tile, B))
        if BT < B:
            BT = _round_up(BT, 8)          # keep output blocks sublane-aligned
    nb = pl.cdiv(B, BT)
    Bp = nb * BT                            # padded *output* rows only (no input copy)

    # NCHW -> (B, C, H*W): pure reshape, stays f32 (cast to bf16 is not needed
    # at all: the conv runs on the VPU in f32).  No zero-pad concatenate: the
    # ragged trailing batch block (if any) is handled by Pallas and the
    # padded output rows are sliced off below.
    x = x_nchw.reshape(B, C, HW)

    cw = params["conv_w"].astype(jnp.float32)                  # (F, C)
    cb = params["conv_b"].reshape(F, 1).astype(jnp.float32)    # (F, 1)
    w1 = params["fc1_w"].astype(jnp.bfloat16)                  # (F, H1)
    b1 = params["fc1_b"].reshape(1, H1).astype(jnp.float32)
    w2 = jnp.zeros((H1, OP), jnp.bfloat16).at[:, :O].set(
        params["fc2_w"].astype(jnp.bfloat16))                  # (H1, OP)
    b2 = jnp.zeros((1, OP), jnp.float32).at[:, :O].set(
        params["fc2_b"].astype(jnp.float32))                   # (1, OP)

    # NOTE: the constant-index weight inputs (cw/w1/w2/biases) are tiny here;
    # for a real backbone (F=512-2048) use pipeline_mode=pl.Buffered(1) on
    # those specs (or a load-once scratch) to halve their VMEM footprint, and
    # re-derive vmem_limit_bytes per generation (<=~56 MiB on v7x's 64 MiB).
    out = pl.pallas_call(
        fused_kernel,
        out_shape=jax.ShapeDtypeStruct((Bp, OP), jnp.float32),
        grid_spec=pltpu.PrefetchScalarGridSpec(
            num_scalar_prefetch=0,
            grid=(nb,),
            in_specs=[
                pl.BlockSpec((BT, C, HW), lambda i: (i, 0, 0)),
                pl.BlockSpec((F, C), lambda i: (0, 0)),
                pl.BlockSpec((F, 1), lambda i: (0, 0)),
                pl.BlockSpec((F, H1), lambda i: (0, 0)),
                pl.BlockSpec((1, H1), lambda i: (0, 0)),
                pl.BlockSpec((H1, OP), lambda i: (0, 0)),
                pl.BlockSpec((1, OP), lambda i: (0, 0)),
            ],
            out_specs=pl.BlockSpec((BT, OP), lambda i: (i, 0)),
            scratch_shapes=[pltpu.VMEM((BT, F), jnp.float32)],
        ),
        compiler_params=pltpu.CompilerParams(
            dimension_semantics=("parallel",),
            vmem_limit_bytes=32 * 1024 * 1024,
        ),
    )(x, cw, cb, w1, b1, w2, b2)

    return out[:B, :O]


def init_params(key, in_channels, num_ftrs, hidden, output_dim):
    ks = jax.random.split(key, 6)

    def lin(k, fan_in, shape):
        # torch.nn.Linear / Conv2d default: U(-1/sqrt(fan_in), 1/sqrt(fan_in))
        bound = 1.0 / jnp.sqrt(jnp.float32(fan_in))
        return jax.random.uniform(k, shape, jnp.float32, -bound, bound)

    return {
        "conv_w": lin(ks[0], in_channels, (num_ftrs, in_channels)),  # (F, C): 1x1 conv (out, in)
        "conv_b": lin(ks[1], in_channels, (num_ftrs,)),
        "fc1_w": lin(ks[2], num_ftrs, (num_ftrs, hidden)),           # stored (in, out)
        "fc1_b": lin(ks[3], num_ftrs, (hidden,)),
        "fc2_w": lin(ks[4], hidden, (hidden, output_dim)),           # stored (in, out)
        "fc2_b": lin(ks[5], hidden, (output_dim,)),
    }


# ----------------------------------------------------------------------------
# References (plain JAX) for correctness checks.
# ----------------------------------------------------------------------------
def _reference_kernel_numerics(x_nchw, params):
    # Matches the kernel's numerics: f32 conv/pool, bf16-input/f32-acc matmuls,
    # exact sigmoid.
    B, C, H, W = x_nchw.shape
    xb = x_nchw.reshape(B, C, H * W)
    z = jnp.einsum("fc,bch->bfh", params["conv_w"], xb)
    z = jnp.maximum(z + params["conv_b"][None, :, None], 0.0)
    feats = jnp.mean(z, axis=-1)
    h = jnp.dot(feats.astype(jnp.bfloat16), params["fc1_w"].astype(jnp.bfloat16),
                preferred_element_type=jnp.float32) + params["fc1_b"]
    h = jnp.maximum(h, 0.0)
    y = jnp.dot(h.astype(jnp.bfloat16), params["fc2_w"].astype(jnp.bfloat16),
                preferred_element_type=jnp.float32) + params["fc2_b"]
    return jax.nn.sigmoid(y)


def _reference_f32(x_nchw, params):
    # Pure-f32 PyTorch semantics.
    B, C, H, W = x_nchw.shape
    xb = x_nchw.reshape(B, C, H * W)
    z = jnp.einsum("fc,bch->bfh", params["conv_w"], xb)
    z = jnp.maximum(z + params["conv_b"][None, :, None], 0.0)
    feats = jnp.mean(z, axis=-1)
    h = jnp.maximum(feats @ params["fc1_w"] + params["fc1_b"], 0.0)
    return jax.nn.sigmoid(h @ params["fc2_w"] + params["fc2_b"])


if __name__ == "__main__":
    B, C, H, W = 2, 4, 16, 16
    NUM_FTRS = 32
    HIDDEN = 256
    OUTPUT_DIM = 8

    key = jax.random.PRNGKey(0)
    k_x, k_p = jax.random.split(key)
    x = jax.random.normal(k_x, (B, C, H, W), jnp.float32)
    params = init_params(k_p, C, NUM_FTRS, HIDDEN, OUTPUT_DIM)

    y = jax.jit(finetune_forward)(x, params)
    y = jax.block_until_ready(y)
    assert y.shape == (B, OUTPUT_DIM)

    # Tight check vs. a reference that mimics the kernel's numerics.
    y_ref_match = _reference_kernel_numerics(x, params)
    assert jnp.allclose(y, y_ref_match, atol=5e-3), "mismatch vs kernel-matched reference"

    # Looser check vs. pure-f32 PyTorch semantics (bf16 only on fc1/fc2 inputs).
    y_ref_f32 = _reference_f32(x, params)
    assert jnp.allclose(y, y_ref_f32, atol=2e-2), "mismatch vs f32 reference"

    print("KERNEL_OK")
</pallas_src>

<mosaic_0001>
module attributes {stable_mosaic.version = 11 : i64} {
  func.func @fused_kernel(%arg0: i32, %arg1: memref<2x4x256xf32, #tpu.memory_space<vmem>>, %arg2: memref<32x4xf32, #tpu.memory_space<vmem>>, %arg3: memref<32x1xf32, #tpu.memory_space<vmem>>, %arg4: memref<32x256xbf16, #tpu.memory_space<vmem>>, %arg5: memref<1x256xf32, #tpu.memory_space<vmem>>, %arg6: memref<256x128xbf16, #tpu.memory_space<vmem>>, %arg7: memref<1x128xf32, #tpu.memory_space<vmem>>, %arg8: memref<2x128xf32, #tpu.memory_space<vmem>>, %arg9: memref<2x32xf32, #tpu.memory_space<vmem>>) attributes {dimension_semantics = [#tpu.dimension_semantics<parallel>], iteration_bounds = array<i64: 1>, scalar_prefetch = 0 : i64, scratch_operands = 1 : i64, tpu.core_type = #tpu.core_type<tc>, window_params = [{transform_indices = @transform_0, window_bounds = array<i64: 2, 4, 256>}, {pipeline_mode = #tpu.pipeline_mode<synchronous>, transform_indices = @transform_1, window_bounds = array<i64: 32, 4>}, {pipeline_mode = #tpu.pipeline_mode<synchronous>, transform_indices = @transform_2, window_bounds = array<i64: 32, 1>}, {pipeline_mode = #tpu.pipeline_mode<synchronous>, transform_indices = @transform_3, window_bounds = array<i64: 32, 256>}, {pipeline_mode = #tpu.pipeline_mode<synchronous>, transform_indices = @transform_4, window_bounds = array<i64: 1, 256>}, {pipeline_mode = #tpu.pipeline_mode<synchronous>, transform_indices = @transform_5, window_bounds = array<i64: 256, 128>}, {pipeline_mode = #tpu.pipeline_mode<synchronous>, transform_indices = @transform_6, window_bounds = array<i64: 1, 128>}, {transform_indices = @transform_7, window_bounds = array<i64: 2, 128>}]} {
    %c0 = arith.constant 0 : index
    %c0_0 = arith.constant 0 : index
    %0 = vector.load %arg2[%c0, %c0_0] : memref<32x4xf32, #tpu.memory_space<vmem>>, vector<32x4xf32>
    %c0_1 = arith.constant 0 : index
    %c0_2 = arith.constant 0 : index
    %1 = vector.load %arg3[%c0_1, %c0_2] : memref<32x1xf32, #tpu.memory_space<vmem>>, vector<32x1xf32>
    %2 = vector.extract_strided_slice %0 {offsets = [0, 0], sizes = [32, 1], strides = [1, 1]} : vector<32x4xf32> to vector<32x1xf32>
    %3 = vector.extract_strided_slice %0 {offsets = [0, 1], sizes = [32, 1], strides = [1, 1]} : vector<32x4xf32> to vector<32x1xf32>
    %4 = vector.extract_strided_slice %0 {offsets = [0, 2], sizes = [32, 1], strides = [1, 1]} : vector<32x4xf32> to vector<32x1xf32>
    %5 = vector.extract_strided_slice %0 {offsets = [0, 3], sizes = [32, 1], strides = [1, 1]} : vector<32x4xf32> to vector<32x1xf32>
    %c0_3 = arith.constant 0 : index
    %c0_4 = arith.constant 0 : index
    %c0_5 = arith.constant 0 : index
    %6 = vector.load %arg1[%c0_3, %c0_4, %c0_5] : memref<2x4x256xf32, #tpu.memory_space<vmem>>, vector<2x4x256xf32>
    %7 = vector.extract_strided_slice %6 {offsets = [0, 0, 0], sizes = [1, 4, 256], strides = [1, 1, 1]} : vector<2x4x256xf32> to vector<1x4x256xf32>
    %8 = vector.shape_cast %7 : vector<1x4x256xf32> to vector<4x256xf32>
    %9 = vector.extract_strided_slice %8 {offsets = [0, 0], sizes = [1, 256], strides = [1, 1]} : vector<4x256xf32> to vector<1x256xf32>
    %10 = vector.shape_cast %9 : vector<1x256xf32> to vector<256xf32>
    %11 = vector.shape_cast %10 : vector<256xf32> to vector<1x256xf32>
    %12 = vector.broadcast %2 : vector<32x1xf32> to vector<32x256xf32>
    %13 = vector.broadcast %11 : vector<1x256xf32> to vector<32x256xf32>
    %14 = arith.mulf %12, %13 : vector<32x256xf32>
    %15 = vector.extract_strided_slice %8 {offsets = [1, 0], sizes = [1, 256], strides = [1, 1]} : vector<4x256xf32> to vector<1x256xf32>
    %16 = vector.shape_cast %15 : vector<1x256xf32> to vector<256xf32>
    %17 = vector.shape_cast %16 : vector<256xf32> to vector<1x256xf32>
    %18 = vector.broadcast %3 : vector<32x1xf32> to vector<32x256xf32>
    %19 = vector.broadcast %17 : vector<1x256xf32> to vector<32x256xf32>
    %20 = arith.mulf %18, %19 : vector<32x256xf32>
    %21 = arith.addf %14, %20 : vector<32x256xf32>
    %22 = vector.extract_strided_slice %8 {offsets = [2, 0], sizes = [1, 256], strides = [1, 1]} : vector<4x256xf32> to vector<1x256xf32>
    %23 = vector.shape_cast %22 : vector<1x256xf32> to vector<256xf32>
    %24 = vector.shape_cast %23 : vector<256xf32> to vector<1x256xf32>
    %25 = vector.broadcast %4 : vector<32x1xf32> to vector<32x256xf32>
    %26 = vector.broadcast %24 : vector<1x256xf32> to vector<32x256xf32>
    %27 = arith.mulf %25, %26 : vector<32x256xf32>
    %28 = arith.addf %21, %27 : vector<32x256xf32>
    %29 = vector.extract_strided_slice %8 {offsets = [3, 0], sizes = [1, 256], strides = [1, 1]} : vector<4x256xf32> to vector<1x256xf32>
    %30 = vector.shape_cast %29 : vector<1x256xf32> to vector<256xf32>
    %31 = vector.shape_cast %30 : vector<256xf32> to vector<1x256xf32>
    %32 = vector.broadcast %5 : vector<32x1xf32> to vector<32x256xf32>
    %33 = vector.broadcast %31 : vector<1x256xf32> to vector<32x256xf32>
    %34 = arith.mulf %32, %33 : vector<32x256xf32>
    %35 = arith.addf %28, %34 : vector<32x256xf32>
    %36 = vector.broadcast %1 : vector<32x1xf32> to vector<32x256xf32>
    %37 = arith.addf %35, %36 : vector<32x256xf32>
    %cst = arith.constant 0.000000e+00 : f32
    %38 = vector.broadcast %cst : f32 to vector<32x256xf32>
    %39 = arith.maximumf %37, %38 : vector<32x256xf32>
    %cst_6 = arith.constant dense<0.000000e+00> : vector<32xf32>
    %40 = vector.multi_reduction <add>, %39, %cst_6 [1] : vector<32x256xf32> to vector<32xf32>
    %cst_7 = arith.constant 3.906250e-03 : f32
    %41 = vector.broadcast %cst_7 : f32 to vector<32xf32>
    %42 = arith.mulf %40, %41 : vector<32xf32>
    %43 = vector.shape_cast %42 : vector<32xf32> to vector<1x32xf32>
    %44 = vector.extract_strided_slice %6 {offsets = [1, 0, 0], sizes = [1, 4, 256], strides = [1, 1, 1]} : vector<2x4x256xf32> to vector<1x4x256xf32>
    %45 = vector.shape_cast %44 : vector<1x4x256xf32> to vector<4x256xf32>
    %46 = vector.extract_strided_slice %45 {offsets = [0, 0], sizes = [1, 256], strides = [1, 1]} : vector<4x256xf32> to vector<1x256xf32>
    %47 = vector.shape_cast %46 : vector<1x256xf32> to vector<256xf32>
    %48 = vector.shape_cast %47 : vector<256xf32> to vector<1x256xf32>
    %49 = vector.broadcast %2 : vector<32x1xf32> to vector<32x256xf32>
    %50 = vector.broadcast %48 : vector<1x256xf32> to vector<32x256xf32>
    %51 = arith.mulf %49, %50 : vector<32x256xf32>
    %52 = vector.extract_strided_slice %45 {offsets = [1, 0], sizes = [1, 256], strides = [1, 1]} : vector<4x256xf32> to vector<1x256xf32>
    %53 = vector.shape_cast %52 : vector<1x256xf32> to vector<256xf32>
    %54 = vector.shape_cast %53 : vector<256xf32> to vector<1x256xf32>
    %55 = vector.broadcast %3 : vector<32x1xf32> to vector<32x256xf32>
    %56 = vector.broadcast %54 : vector<1x256xf32> to vector<32x256xf32>
    %57 = arith.mulf %55, %56 : vector<32x256xf32>
    %58 = arith.addf %51, %57 : vector<32x256xf32>
    %59 = vector.extract_strided_slice %45 {offsets = [2, 0], sizes = [1, 256], strides = [1, 1]} : vector<4x256xf32> to vector<1x256xf32>
    %60 = vector.shape_cast %59 : vector<1x256xf32> to vector<256xf32>
    %61 = vector.shape_cast %60 : vector<256xf32> to vector<1x256xf32>
    %62 = vector.broadcast %4 : vector<32x1xf32> to vector<32x256xf32>
    %63 = vector.broadcast %61 : vector<1x256xf32> to vector<32x256xf32>
    %64 = arith.mulf %62, %63 : vector<32x256xf32>
    %65 = arith.addf %58, %64 : vector<32x256xf32>
    %66 = vector.extract_strided_slice %45 {offsets = [3, 0], sizes = [1, 256], strides = [1, 1]} : vector<4x256xf32> to vector<1x256xf32>
    %67 = vector.shape_cast %66 : vector<1x256xf32> to vector<256xf32>
    %68 = vector.shape_cast %67 : vector<256xf32> to vector<1x256xf32>
    %69 = vector.broadcast %5 : vector<32x1xf32> to vector<32x256xf32>
    %70 = vector.broadcast %68 : vector<1x256xf32> to vector<32x256xf32>
    %71 = arith.mulf %69, %70 : vector<32x256xf32>
    %72 = arith.addf %65, %71 : vector<32x256xf32>
    %73 = vector.broadcast %1 : vector<32x1xf32> to vector<32x256xf32>
    %74 = arith.addf %72, %73 : vector<32x256xf32>
    %cst_8 = arith.constant 0.000000e+00 : f32
    %75 = vector.broadcast %cst_8 : f32 to vector<32x256xf32>
    %76 = arith.maximumf %74, %75 : vector<32x256xf32>
    %cst_9 = arith.constant dense<0.000000e+00> : vector<32xf32>
    %77 = vector.multi_reduction <add>, %76, %cst_9 [1] : vector<32x256xf32> to vector<32xf32>
    %cst_10 = arith.constant 3.906250e-03 : f32
    %78 = vector.broadcast %cst_10 : f32 to vector<32xf32>
    %79 = arith.mulf %77, %78 : vector<32xf32>
    %80 = vector.shape_cast %79 : vector<32xf32> to vector<1x32xf32>
    %81 = tpu.concatenate %43, %80 in 0 : vector<1x32xf32>, vector<1x32xf32> -> vector<2x32xf32>
    %c0_11 = arith.constant 0 : index
    %c0_12 = arith.constant 0 : index
    %82 = vector.load %arg9[%c0_11, %c0_12] : memref<2x32xf32, #tpu.memory_space<vmem>>, vector<2x32xf32>
    tpu.vector_store %arg9[%c0_11, %c0_12], %81 {strides = array<i32>} : memref<2x32xf32, #tpu.memory_space<vmem>>, vector<2x32xf32>,
    %c0_13 = arith.constant 0 : index
    %c0_14 = arith.constant 0 : index
    %83 = vector.load %arg9[%c0_13, %c0_14] : memref<2x32xf32, #tpu.memory_space<vmem>>, vector<2x32xf32>
    %84 = arith.truncf %83 : vector<2x32xf32> to vector<2x32xbf16>
    %c0_15 = arith.constant 0 : index
    %c0_16 = arith.constant 0 : index
    %85 = vector.load %arg4[%c0_15, %c0_16] : memref<32x256xbf16, #tpu.memory_space<vmem>>, vector<32x256xbf16>
    %cst_17 = arith.constant dense<0.000000e+00> : vector<2x256xf32>
    %86 = tpu.matmul %84, %85, %cst_17 {dimension_numbers = #tpu.dot_dimension_numbers<[1], [0], [0], [1], [0, 0, 1, 1], [], []>} : vector<2x32xbf16>, vector<32x256xbf16>, vector<2x256xf32> -> vector<2x256xf32>
    %c0_18 = arith.constant 0 : index
    %c0_19 = arith.constant 0 : index
    %87 = vector.load %arg5[%c0_18, %c0_19] : memref<1x256xf32, #tpu.memory_space<vmem>>, vector<1x256xf32>
    %88 = vector.broadcast %87 : vector<1x256xf32> to vector<2x256xf32>
    %89 = arith.addf %86, %88 : vector<2x256xf32>
    %cst_20 = arith.constant 0.000000e+00 : f32
    %90 = vector.broadcast %cst_20 : f32 to vector<2x256xf32>
    %91 = arith.maximumf %89, %90 : vector<2x256xf32>
    %92 = arith.truncf %91 : vector<2x256xf32> to vector<2x256xbf16>
    %c0_21 = arith.constant 0 : index
    %c0_22 = arith.constant 0 : index
    %93 = vector.load %arg6[%c0_21, %c0_22] : memref<256x128xbf16, #tpu.memory_space<vmem>>, vector<256x128xbf16>
    %cst_23 = arith.constant dense<0.000000e+00> : vector<2x128xf32>
    %94 = tpu.matmul %92, %93, %cst_23 {dimension_numbers = #tpu.dot_dimension_numbers<[1], [0], [0], [1], [0, 0, 1, 1], [], []>} : vector<2x256xbf16>, vector<256x128xbf16>, vector<2x128xf32> -> vector<2x128xf32>
    %c0_24 = arith.constant 0 : index
    %c0_25 = arith.constant 0 : index
    %95 = vector.load %arg7[%c0_24, %c0_25] : memref<1x128xf32, #tpu.memory_space<vmem>>, vector<1x128xf32>
    %96 = vector.broadcast %95 : vector<1x128xf32> to vector<2x128xf32>
    %97 = arith.addf %94, %96 : vector<2x128xf32>
    %cst_26 = arith.constant 0.000000e+00 : f32
    %98 = vector.broadcast %cst_26 : f32 to vector<2x128xf32>
    %99 = arith.subf %98, %97 : vector<2x128xf32>
    %100 = math.exp %99 : vector<2x128xf32>
    %cst_27 = arith.constant 1.000000e+00 : f32
    %101 = vector.broadcast %cst_27 : f32 to vector<2x128xf32>
    %102 = arith.addf %101, %100 : vector<2x128xf32>
    %cst_28 = arith.constant 1.000000e+00 : f32
    %103 = vector.broadcast %cst_28 : f32 to vector<2x128xf32>
    %104 = arith.divf %103, %102 : vector<2x128xf32>
    %c0_29 = arith.constant 0 : index
    %c0_30 = arith.constant 0 : index
    %105 = vector.load %arg8[%c0_29, %c0_30] : memref<2x128xf32, #tpu.memory_space<vmem>>, vector<2x128xf32>
    tpu.vector_store %arg8[%c0_29, %c0_30], %104 {strides = array<i32>} : memref<2x128xf32, #tpu.memory_space<vmem>>, vector<2x128xf32>,
    return
  }
  func.func @transform_0(%arg0: i32) -> (i32, i32, i32) {
    %c0_i32 = arith.constant 0 : i32
    %c0_i32_0 = arith.constant 0 : i32
    %c0_i32_1 = arith.constant 0 : i32
    return %arg0, %c0_i32, %c0_i32_0 : i32, i32, i32
  }
  func.func @transform_1(%arg0: i32) -> (i32, i32) {
    %c0_i32 = arith.constant 0 : i32
    %c0_i32_0 = arith.constant 0 : i32
    %c0_i32_1 = arith.constant 0 : i32
    return %c0_i32, %c0_i32_0 : i32, i32
  }
  func.func @transform_2(%arg0: i32) -> (i32, i32) {
    %c0_i32 = arith.constant 0 : i32
    %c0_i32_0 = arith.constant 0 : i32
    %c0_i32_1 = arith.constant 0 : i32
    return %c0_i32, %c0_i32_0 : i32, i32
  }
  func.func @transform_3(%arg0: i32) -> (i32, i32) {
    %c0_i32 = arith.constant 0 : i32
    %c0_i32_0 = arith.constant 0 : i32
    %c0_i32_1 = arith.constant 0 : i32
    return %c0_i32, %c0_i32_0 : i32, i32
  }
  func.func @transform_4(%arg0: i32) -> (i32, i32) {
    %c0_i32 = arith.constant 0 : i32
    %c0_i32_0 = arith.constant 0 : i32
    %c0_i32_1 = arith.constant 0 : i32
    return %c0_i32, %c0_i32_0 : i32, i32
  }
  func.func @transform_5(%arg0: i32) -> (i32, i32) {
    %c0_i32 = arith.constant 0 : i32
    %c0_i32_0 = arith.constant 0 : i32
    %c0_i32_1 = arith.constant 0 : i32
    return %c0_i32, %c0_i32_0 : i32, i32
  }
  func.func @transform_6(%arg0: i32) -> (i32, i32) {
    %c0_i32 = arith.constant 0 : i32
    %c0_i32_0 = arith.constant 0 : i32
    %c0_i32_1 = arith.constant 0 : i32
    return %c0_i32, %c0_i32_0 : i32, i32
  }
  func.func @transform_7(%arg0: i32) -> (i32, i32) {
    %c0_i32 = arith.constant 0 : i32
    %c0_i32_0 = arith.constant 0 : i32
    return %arg0, %c0_i32 : i32, i32
  }
}

</mosaic_0001>

<llo_original>
// kernel: finetune_forward.1
$region0: #{finetune_forward.1}
  #allocation0 [shape = 'u32[]', space=smem, size = 0x4, offset = 0x4, fixed_abs, tag = 'smem constant byte address 0x4 - core index']
  #allocation1 [shape = 'u32[144,128]{1,0:T(1,128)}', space=vmem, size = 0x12000, scoped, tag = 'internal scratch']
  #allocation2 [shape = 'f32[2,32]{1,0:T(2,128)}', space=vmem, size = 0x400, scoped, tag = 'scratch operand']
  %s0 = inlined_call_operand.vmem [shape: f32[2,4,256], index: 0, kind: input, shape index: {}]
  %s1 = inlined_call_operand.vmem [shape: f32[32,4], index: 1, kind: input, shape index: {}]
  %s2 = inlined_call_operand.vmem [shape: f32[32,1], index: 2, kind: input, shape index: {}]
  %s3 = inlined_call_operand.vmem [shape: bf16[32,256], index: 3, kind: input, shape index: {}]
  %s4 = inlined_call_operand.vmem [shape: f32[1,256], index: 4, kind: input, shape index: {}]
  %s5 = inlined_call_operand.vmem [shape: bf16[256,128], index: 5, kind: input, shape index: {}]
  %s6 = inlined_call_operand.vmem [shape: f32[1,128], index: 6, kind: input, shape index: {}]
  %s7 = inlined_call_operand.hbm [shape: f32[2,128], index: 7, kind: output, shape index: {}]
  %s8 = sld [smem:[#allocation0]]
  $region38: #{finetune_forward.1} parent=0
    _
  %s10 = ssub.s32 1, %s8
  %s11 = scalar_select 0, %s10, %s8
  $region1: #{finetune_forward.1} parent=0
    #allocation3 [shape = 'u8[1024]{0}', space=vmem, size = 0x400, scoped, tag = 'output window, operand 0, single buffered']
    #allocation4 [shape = 's32[1]{0}', space=sflag, size = 0x4, scoped, tag = 'scoped memory for finetune_forward.1']
    %12 = vsyncpa [#allocation4], 0
    // Predicated region
    $region2: #{finetune_forward.1} parent=1 // pred_check
      _
    $region3: #{finetune_forward.1} parent=1 // pred_check_branch
      %14 = sbr.rel (0) target = $region5
    $region4: #{finetune_forward.1} parent=1 // pred_region
      _
    $region5: #{finetune_forward.1} parent=1 // pred_fallthru
      _
    // Predicated region
    $region6: #{finetune_forward.1} parent=1 // pred_check
      _
    $region7: #{finetune_forward.1} parent=1 // pred_check_branch
      %16 = sbr.rel (0) target = $region9
    $region8: #{finetune_forward.1} parent=1 // pred_region
      _
    $region9: #{finetune_forward.1} parent=1 // pred_fallthru
      _
    // Predicated region
    $region10: #{finetune_forward.1} parent=1 // pred_check
      _
    $region11: #{finetune_forward.1} parent=1 // pred_check_branch
      %18 = sbr.rel (0) target = $region13
    $region12: #{finetune_forward.1} parent=1 // pred_region
      _
    $region13: #{finetune_forward.1} parent=1 // pred_fallthru
      _
    // Predicated region
    $region14: #{finetune_forward.1} parent=1 // pred_check
      _
    $region15: #{finetune_forward.1} parent=1 // pred_check_branch
      %20 = sbr.rel (0) target = $region17
    $region16: #{finetune_forward.1} parent=1 // pred_region
      _
    $region17: #{finetune_forward.1} parent=1 // pred_fallthru
      _
    // Predicated region
    $region18: #{finetune_forward.1} parent=1 // pred_check
      _
    $region19: #{finetune_forward.1} parent=1 // pred_check_branch
      %22 = sbr.rel (0) target = $region21
    $region20: #{finetune_forward.1} parent=1 // pred_region
      _
    $region21: #{finetune_forward.1} parent=1 // pred_fallthru
      _
    // Predicated region
    $region22: #{finetune_forward.1} parent=1 // pred_check
      _
    $region23: #{finetune_forward.1} parent=1 // pred_check_branch
      %24 = sbr.rel (0) target = $region25
    $region24: #{finetune_forward.1} parent=1 // pred_region
      _
    $region25: #{finetune_forward.1} parent=1 // pred_fallthru
      _
    // Predicated region
    $region26: #{finetune_forward.1} parent=1 // pred_check
      _
    $region27: #{finetune_forward.1} parent=1 // pred_check_branch
      %26 = sbr.rel (0) target = $region29
    $region28: #{finetune_forward.1} parent=1 // pred_region
      _
    $region29: #{finetune_forward.1} parent=1 // pred_fallthru
      _
    %v28 = vld [vmem:[%s1] sm:$0xff]
    %v29 = vld [vmem:[%s1 + $0x8] sm:$0xff]
    %v30 = vld [vmem:[%s1 + $0x10] sm:$0xff]
    %v31 = vld [vmem:[%s1 + $0x18] sm:$0xff]
    %v32 = vld [vmem:[%s2] sm:$0xff]
    %v33 = vld [vmem:[%s2 + $0x8] sm:$0xff]
    %v34 = vld [vmem:[%s2 + $0x10] sm:$0xff]
    %v35 = vld [vmem:[%s2 + $0x18] sm:$0xff]
    %v36 = vld [vmem:[%s0] sm:$0xff]
    %v37 = vld [vmem:[%s0 + $0x8] sm:$0xff]
    %39 = vset.pattern.permute.xlu0 0
    %40 = vperm.xlu0 %39, %v28
    %v41 = vpop.permute.xlu0 %40
    %44 = vset.pattern.permute.xlu0 0
    %45 = vperm.xlu0 %44, %v29
    %v46 = vpop.permute.xlu0 %45
    %49 = vset.pattern.permute.xlu0 0
    %50 = vperm.xlu0 %49, %v30
    %v51 = vpop.permute.xlu0 %50
    %54 = vset.pattern.permute.xlu0 0
    %55 = vperm.xlu0 %54, %v31
    %v56 = vpop.permute.xlu0 %55
    %v59 = vlaneseq
    %v60 = vshrl.u32 %v59, 7
    %v61 = vsub.s32 0, %v60
    %v62 = vrot.slane %v36, %v61
    %v63 = vlaneseq
    %v64 = vshrl.u32 %v63, 7
    %v65 = vsub.s32 4, %v64
    %v66 = vrot.slane %v36, %v65
    %v69 = vlaneseq
    %v70 = vshrl.u32 %v69, 7
    %v71 = vsub.s32 0, %v70
    %v72 = vrot.slane %v62, %v71
    %v73 = vlaneseq
    %v74 = vshrl.u32 %v73, 7
    %v75 = vsub.s32 0, %v74
    %v76 = vrot.slane %v66, %v75
    %v77 = vmul.f32 %v41, %v72
    %v78 = vmul.f32 %v41, %v76
    %v79 = vmul.f32 %v46, %v72
    %v80 = vmul.f32 %v46, %v76
    %v81 = vmul.f32 %v51, %v72
    %v82 = vmul.f32 %v51, %v76
    %v83 = vmul.f32 %v56, %v72
    %v84 = vmul.f32 %v56, %v76
    %85 = vset.pattern.permute.xlu0 1
    %86 = vperm.xlu0 %85, %v28
    %v87 = vpop.permute.xlu0 %86
    %89 = vset.pattern.permute.xlu0 1
    %90 = vperm.xlu0 %89, %v29
    %v91 = vpop.permute.xlu0 %90
    %93 = vset.pattern.permute.xlu0 1
    %94 = vperm.xlu0 %93, %v30
    %v95 = vpop.permute.xlu0 %94
    %97 = vset.pattern.permute.xlu0 1
    %98 = vperm.xlu0 %97, %v31
    %v99 = vpop.permute.xlu0 %98
    %v101 = vlaneseq
    %v102 = vshrl.u32 %v101, 7
    %v103 = vsub.s32 1, %v102
    %v104 = vrot.slane %v36, %v103
    %v105 = vlaneseq
    %v106 = vshrl.u32 %v105, 7
    %v107 = vsub.s32 5, %v106
    %v108 = vrot.slane %v36, %v107
    %v111 = vlaneseq
    %v112 = vshrl.u32 %v111, 7
    %v113 = vsub.s32 1, %v112
    %v114 = vrot.slane %v104, %v113
    %v115 = vlaneseq
    %v116 = vshrl.u32 %v115, 7
    %v117 = vsub.s32 1, %v116
    %v118 = vrot.slane %v108, %v117
    %v119 = vmul.f32 %v87, %v114
    %v120 = vmul.f32 %v87, %v118
    %v121 = vmul.f32 %v91, %v114
    %v122 = vmul.f32 %v91, %v118
    %v123 = vmul.f32 %v95, %v114
    %v124 = vmul.f32 %v95, %v118
    %v125 = vmul.f32 %v99, %v114
    %v126 = vmul.f32 %v99, %v118
    %v127 = vadd.f32 %v77, %v119
    %v128 = vadd.f32 %v78, %v120
    %v129 = vadd.f32 %v79, %v121
    %v130 = vadd.f32 %v80, %v122
    %v131 = vadd.f32 %v81, %v123
    %v132 = vadd.f32 %v82, %v124
    %v133 = vadd.f32 %v83, %v125
    %v134 = vadd.f32 %v84, %v126
    %135 = vset.pattern.permute.xlu0 2
    %136 = vperm.xlu0 %135, %v28
    %v137 = vpop.permute.xlu0 %136
    %139 = vset.pattern.permute.xlu0 2
    %140 = vperm.xlu0 %139, %v29
    %v141 = vpop.permute.xlu0 %140
    %143 = vset.pattern.permute.xlu0 2
    %144 = vperm.xlu0 %143, %v30
    %v145 = vpop.permute.xlu0 %144
    %147 = vset.pattern.permute.xlu0 2
    %148 = vperm.xlu0 %147, %v31
    %v149 = vpop.permute.xlu0 %148
    %v151 = vlaneseq
    %v152 = vshrl.u32 %v151, 7
    %v153 = vsub.s32 2, %v152
    %v154 = vrot.slane %v36, %v153
    %v155 = vlaneseq
    %v156 = vshrl.u32 %v155, 7
    %v157 = vsub.s32 6, %v156
    %v158 = vrot.slane %v36, %v157
    %v161 = vlaneseq
    %v162 = vshrl.u32 %v161, 7
    %v163 = vsub.s32 2, %v162
    %v164 = vrot.slane %v154, %v163
    %v165 = vlaneseq
    %v166 = vshrl.u32 %v165, 7
    %v167 = vsub.s32 2, %v166
    %v168 = vrot.slane %v158, %v167
    %v169 = vmul.f32 %v137, %v164
    %v170 = vmul.f32 %v137, %v168
    %v171 = vmul.f32 %v141, %v164
    %v172 = vmul.f32 %v141, %v168
    %v173 = vmul.f32 %v145, %v164
    %v174 = vmul.f32 %v145, %v168
    %v175 = vmul.f32 %v149, %v164
    %v176 = vmul.f32 %v149, %v168
    %v177 = vadd.f32 %v127, %v169
    %v178 = vadd.f32 %v128, %v170
    %v179 = vadd.f32 %v129, %v171
    %v180 = vadd.f32 %v130, %v172
    %v181 = vadd.f32 %v131, %v173
    %v182 = vadd.f32 %v132, %v174
    %v183 = vadd.f32 %v133, %v175
    %v184 = vadd.f32 %v134, %v176
    %185 = vset.pattern.permute.xlu0 3
    %186 = vperm.xlu0 %185, %v28
    %v187 = vpop.permute.xlu0 %186
    %189 = vset.pattern.permute.xlu0 3
    %190 = vperm.xlu0 %189, %v29
    %v191 = vpop.permute.xlu0 %190
    %193 = vset.pattern.permute.xlu0 3
    %194 = vperm.xlu0 %193, %v30
    %v195 = vpop.permute.xlu0 %194
    %197 = vset.pattern.permute.xlu0 3
    %198 = vperm.xlu0 %197, %v31
    %v199 = vpop.permute.xlu0 %198
    %v201 = vlaneseq
    %v202 = vshrl.u32 %v201, 7
    %v203 = vsub.s32 3, %v202
    %v204 = vrot.slane %v36, %v203
    %v205 = vlaneseq
    %v206 = vshrl.u32 %v205, 7
    %v207 = vsub.s32 7, %v206
    %v208 = vrot.slane %v36, %v207
    %v211 = vlaneseq
    %v212 = vshrl.u32 %v211, 7
    %v213 = vsub.s32 3, %v212
    %v214 = vrot.slane %v204, %v213
    %v215 = vlaneseq
    %v216 = vshrl.u32 %v215, 7
    %v217 = vsub.s32 3, %v216
    %v218 = vrot.slane %v208, %v217
    %v219 = vmul.f32 %v187, %v214
    %v220 = vmul.f32 %v187, %v218
    %v221 = vmul.f32 %v191, %v214
    %v222 = vmul.f32 %v191, %v218
    %v223 = vmul.f32 %v195, %v214
    %v224 = vmul.f32 %v195, %v218
    %v225 = vmul.f32 %v199, %v214
    %v226 = vmul.f32 %v199, %v218
    %v227 = vadd.f32 %v177, %v219
    %v228 = vadd.f32 %v178, %v220
    %v229 = vadd.f32 %v179, %v221
    %v230 = vadd.f32 %v180, %v222
    %v231 = vadd.f32 %v181, %v223
    %v232 = vadd.f32 %v182, %v224
    %v233 = vadd.f32 %v183, %v225
    %v234 = vadd.f32 %v184, %v226
    %236 = vset.pattern.permute.xlu0 0
    %237 = vperm.xlu0 %236, %v32
    %v238 = vpop.permute.xlu0 %237
    %241 = vset.pattern.permute.xlu0 0
    %242 = vperm.xlu0 %241, %v33
    %v243 = vpop.permute.xlu0 %242
    %246 = vset.pattern.permute.xlu0 0
    %247 = vperm.xlu0 %246, %v34
    %v248 = vpop.permute.xlu0 %247
    %251 = vset.pattern.permute.xlu0 0
    %252 = vperm.xlu0 %251, %v35
    %v253 = vpop.permute.xlu0 %252
    %v255 = vadd.f32 %v227, %v238
    %v256 = vadd.f32 %v228, %v238
    %v257 = vadd.f32 %v229, %v243
    %v258 = vadd.f32 %v230, %v243
    %v259 = vadd.f32 %v231, %v248
    %v260 = vadd.f32 %v232, %v248
    %v261 = vadd.f32 %v233, %v253
    %v262 = vadd.f32 %v234, %v253
    %v263 = vmax.f32 %v255, 0.0
    %v264 = vmax.f32 %v256, 0.0
    %v265 = vmax.f32 %v257, 0.0
    %v266 = vmax.f32 %v258, 0.0
    %v267 = vmax.f32 %v259, 0.0
    %v268 = vmax.f32 %v260, 0.0
    %v269 = vmax.f32 %v261, 0.0
    %v270 = vmax.f32 %v262, 0.0
    %v271 = vadd.f32 %v263, %v264
    %272 = vadd.xlane.f32.xlu0 %v271
    %v273 = vpop.xlane.xlu0 %272
    %v274 = vadd.f32 %v265, %v266
    %275 = vadd.xlane.f32.xlu0 %v274
    %v276 = vpop.xlane.xlu0 %275
    %v277 = vadd.f32 %v267, %v268
    %278 = vadd.xlane.f32.xlu0 %v277
    %v279 = vpop.xlane.xlu0 %278
    %v280 = vadd.f32 %v269, %v270
    %281 = vadd.xlane.f32.xlu0 %v280
    %v282 = vpop.xlane.xlu0 %281
    %v283 = vmul.f32 %v273, 0.00390625
    %v284 = vmul.f32 %v276, 0.00390625
    %v285 = vmul.f32 %v279, 0.00390625
    %v286 = vmul.f32 %v282, 0.00390625
    %v288 = vlaneseq
    %v289 = vshrl.u32 %v288, 7
    %v290 = vsub.s32 0, %v289
    %v291 = vrot.slane %v37, %v290
    %v292 = vlaneseq
    %v293 = vshrl.u32 %v292, 7
    %v294 = vsub.s32 4, %v293
    %v295 = vrot.slane %v37, %v294
    %v298 = vlaneseq
    %v299 = vshrl.u32 %v298, 7
    %v300 = vsub.s32 0, %v299
    %v301 = vrot.slane %v291, %v300
    %v302 = vlaneseq
    %v303 = vshrl.u32 %v302, 7
    %v304 = vsub.s32 0, %v303
    %v305 = vrot.slane %v295, %v304
    %v306 = vmul.f32 %v41, %v301
    %v307 = vmul.f32 %v41, %v305
    %v308 = vmul.f32 %v46, %v301
    %v309 = vmul.f32 %v46, %v305
    %v310 = vmul.f32 %v51, %v301
    %v311 = vmul.f32 %v51, %v305
    %v312 = vmul.f32 %v56, %v301
    %v313 = vmul.f32 %v56, %v305
    %v314 = vlaneseq
    %v315 = vshrl.u32 %v314, 7
    %v316 = vsub.s32 1, %v315
    %v317 = vrot.slane %v37, %v316
    %v318 = vlaneseq
    %v319 = vshrl.u32 %v318, 7
    %v320 = vsub.s32 5, %v319
    %v321 = vrot.slane %v37, %v320
    %v324 = vlaneseq
    %v325 = vshrl.u32 %v324, 7
    %v326 = vsub.s32 1, %v325
    %v327 = vrot.slane %v317, %v326
    %v328 = vlaneseq
    %v329 = vshrl.u32 %v328, 7
    %v330 = vsub.s32 1, %v329
    %v331 = vrot.slane %v321, %v330
    %v332 = vmul.f32 %v87, %v327
    %v333 = vmul.f32 %v87, %v331
    %v334 = vmul.f32 %v91, %v327
    %v335 = vmul.f32 %v91, %v331
    %v336 = vmul.f32 %v95, %v327
    %v337 = vmul.f32 %v95, %v331
    %v338 = vmul.f32 %v99, %v327
    %v339 = vmul.f32 %v99, %v331
    %v340 = vadd.f32 %v306, %v332
    %v341 = vadd.f32 %v307, %v333
    %v342 = vadd.f32 %v308, %v334
    %v343 = vadd.f32 %v309, %v335
    %v344 = vadd.f32 %v310, %v336
    %v345 = vadd.f32 %v311, %v337
    %v346 = vadd.f32 %v312, %v338
    %v347 = vadd.f32 %v313, %v339
    %v348 = vlaneseq
    %v349 = vshrl.u32 %v348, 7
    %v350 = vsub.s32 2, %v349
    %v351 = vrot.slane %v37, %v350
    %v352 = vlaneseq
    %v353 = vshrl.u32 %v352, 7
    %v354 = vsub.s32 6, %v353
    %v355 = vrot.slane %v37, %v354
    %v358 = vlaneseq
    %v359 = vshrl.u32 %v358, 7
    %v360 = vsub.s32 2, %v359
    %v361 = vrot.slane %v351, %v360
    %v362 = vlaneseq
    %v363 = vshrl.u32 %v362, 7
    %v364 = vsub.s32 2, %v363
    %v365 = vrot.slane %v355, %v364
    %v366 = vmul.f32 %v137, %v361
    %v367 = vmul.f32 %v137, %v365
    %v368 = vmul.f32 %v141, %v361
    %v369 = vmul.f32 %v141, %v365
    %v370 = vmul.f32 %v145, %v361
    %v371 = vmul.f32 %v145, %v365
    %v372 = vmul.f32 %v149, %v361
    %v373 = vmul.f32 %v149, %v365
    %v374 = vadd.f32 %v340, %v366
    %v375 = vadd.f32 %v341, %v367
    %v376 = vadd.f32 %v342, %v368
    %v377 = vadd.f32 %v343, %v369
    %v378 = vadd.f32 %v344, %v370
    %v379 = vadd.f32 %v345, %v371
    %v380 = vadd.f32 %v346, %v372
    %v381 = vadd.f32 %v347, %v373
    %v382 = vlaneseq
    %v383 = vshrl.u32 %v382, 7
    %v384 = vsub.s32 3, %v383
    %v385 = vrot.slane %v37, %v384
    %v386 = vlaneseq
    %v387 = vshrl.u32 %v386, 7
    %v388 = vsub.s32 7, %v387
    %v389 = vrot.slane %v37, %v388
    %v392 = vlaneseq
    %v393 = vshrl.u32 %v392, 7
    %v394 = vsub.s32 3, %v393
    %v395 = vrot.slane %v385, %v394
    %v396 = vlaneseq
    %v397 = vshrl.u32 %v396, 7
    %v398 = vsub.s32 3, %v397
    %v399 = vrot.slane %v389, %v398
    %v400 = vmul.f32 %v187, %v395
    %v401 = vmul.f32 %v187, %v399
    %v402 = vmul.f32 %v191, %v395
    %v403 = vmul.f32 %v191, %v399
    %v404 = vmul.f32 %v195, %v395
    %v405 = vmul.f32 %v195, %v399
    %v406 = vmul.f32 %v199, %v395
    %v407 = vmul.f32 %v199, %v399
    %v408 = vadd.f32 %v374, %v400
    %v409 = vadd.f32 %v375, %v401
    %v410 = vadd.f32 %v376, %v402
    %v411 = vadd.f32 %v377, %v403
    %v412 = vadd.f32 %v378, %v404
    %v413 = vadd.f32 %v379, %v405
    %v414 = vadd.f32 %v380, %v406
    %v415 = vadd.f32 %v381, %v407
    %v416 = vadd.f32 %v408, %v238
    %v417 = vadd.f32 %v409, %v238
    %v418 = vadd.f32 %v410, %v243
    %v419 = vadd.f32 %v411, %v243
    %v420 = vadd.f32 %v412, %v248
    %v421 = vadd.f32 %v413, %v248
    %v422 = vadd.f32 %v414, %v253
    %v423 = vadd.f32 %v415, %v253
    %v424 = vmax.f32 %v416, 0.0
    %v425 = vmax.f32 %v417, 0.0
    %v426 = vmax.f32 %v418, 0.0
    %v427 = vmax.f32 %v419, 0.0
    %v428 = vmax.f32 %v420, 0.0
    %v429 = vmax.f32 %v421, 0.0
    %v430 = vmax.f32 %v422, 0.0
    %v431 = vmax.f32 %v423, 0.0
    %v432 = vadd.f32 %v424, %v425
    %433 = vadd.xlane.f32.xlu0 %v432
    %v434 = vpop.xlane.xlu0 %433
    %v435 = vadd.f32 %v426, %v427
    %436 = vadd.xlane.f32.xlu0 %v435
    %v437 = vpop.xlane.xlu0 %436
    %v438 = vadd.f32 %v428, %v429
    %439 = vadd.xlane.f32.xlu0 %v438
    %v440 = vpop.xlane.xlu0 %439
    %v441 = vadd.f32 %v430, %v431
    %442 = vadd.xlane.f32.xlu0 %v441
    %v443 = vpop.xlane.xlu0 %442
    %v444 = vmul.f32 %v434, 0.00390625
    %v445 = vmul.f32 %v437, 0.00390625
    %v446 = vmul.f32 %v440, 0.00390625
    %v447 = vmul.f32 %v443, 0.00390625
    %v452 = vlaneseq
    %v453 = vand.u32 %v452, 127
    %v454 = vlaneseq
    %v455 = vshrl.u32 %v454, 7
    %v456 = vsub.s32 %v453, %v455
    %v457 = vrot.slane %v283, %v456
    %v458 = vadd.s32 %v453, 4294967288
    %v459 = vlaneseq
    %v460 = vshrl.u32 %v459, 7
    %v461 = vsub.s32 %v458, %v460
    %v462 = vrot.slane %v284, %v461
    %vm463 = vcmask 130112
    %v464 = vsel %vm463, %v462, %v457
    %v465 = vadd.s32 %v453, 4294967280
    %v466 = vlaneseq
    %v467 = vshrl.u32 %v466, 7
    %v468 = vsub.s32 %v465, %v467
    %v469 = vrot.slane %v285, %v468
    %vm470 = vcmask 195712
    %v471 = vsel %vm470, %v469, %v464
    %v472 = vadd.s32 %v453, 4294967272
    %v473 = vlaneseq
    %v474 = vshrl.u32 %v473, 7
    %v475 = vsub.s32 %v472, %v474
    %v476 = vrot.slane %v286, %v475
    %vm477 = vcmask 261312
    %v478 = vsel %vm477, %v476, %v471
    %v484 = vlaneseq
    %v485 = vshrl.u32 %v484, 7
    %v486 = vsub.s32 %v453, %v485
    %v487 = vrot.slane %v444, %v486
    %v488 = vlaneseq
    %v489 = vshrl.u32 %v488, 7
    %v490 = vsub.s32 %v458, %v489
    %v491 = vrot.slane %v445, %v490
    %v492 = vsel %vm463, %v491, %v487
    %v493 = vlaneseq
    %v494 = vshrl.u32 %v493, 7
    %v495 = vsub.s32 %v465, %v494
    %v496 = vrot.slane %v446, %v495
    %v497 = vsel %vm470, %v496, %v492
    %v498 = vlaneseq
    %v499 = vshrl.u32 %v498, 7
    %v500 = vsub.s32 %v472, %v499
    %v501 = vrot.slane %v447, %v500
    %v502 = vsel %vm477, %v501, %v497
    %vm504 = vcmask 1040384
    %v505 = vsel %vm504, %v478, %v502
    %vm506 = vcmask 254976
    %507 = vst.msk [vmem:[#allocation2] sm:$0x3] %vm506, %v505
    %v508 = vld [vmem:[#allocation2] sm:$0x3]
    %v509 = vpack.c.bf16 %v508, %v508
    %v510 = vld [vmem:[%s3] sm:$0xff]
    %v511 = vld [vmem:[%s3 + $0x8] sm:$0xff]
    %v512 = vld [vmem:[%s3 + $0x10] sm:$0xff]
    %v513 = vld [vmem:[%s3 + $0x18] sm:$0xff]
    %v514 = vld [vmem:[%s4] sm:$0x3]
    %v516 = vlaneseq
    %v517 = vshrl.u32 %v516, 7
    %v518 = vsub.s32 0, %v517
    %v519 = vrot.slane %v514, %v518
    %v520 = vlaneseq
    %v521 = vshrl.u32 %v520, 7
    %v522 = vsub.s32 1, %v521
    %v523 = vrot.slane %v514, %v522
    %v530 = vunpack.c.l.b16 %v510
    %v531 = vunpack.c.h.b16 %v510
    %v532 = vunpack.c.l.b16 %v511
    %v533 = vunpack.c.h.b16 %v511
    %v534 = vunpack.c.l.b16 %v512
    %v535 = vunpack.c.h.b16 %v512
    %v536 = vunpack.c.l.b16 %v513
    %v537 = vunpack.c.h.b16 %v513
    %v538 = vpack.c.b16 %v532, %v530
    %v539 = vpack.c.b16 %v533, %v531
    %v540 = vpack.c.b16 %v536, %v534
    %v541 = vpack.c.b16 %v537, %v535
    %vm546 = vcmask 261120
    %v548 = vsel %vm546, %v509, 0
    %550 = vmatprep.subr.bf16.mxu0 0
    %551 = vmatpush1.bf16.msra.mxu0 0
    %552 = vmatprep.subr.bf16.mxu0 0
    %553 = vmatpush1.bf16.msra.mxu0 0
    %554 = vmatprep.subr.bf16.mxu0 0
    %555 = vmatpush1.bf16.msra.mxu0 0
    %556 = vmatprep.subr.bf16.mxu0 0
    %557 = vmatpush1.bf16.msra.mxu0 0
    %558 = vmatprep.subr.bf16.mxu0 0
    %559 = vmatpush1.bf16.msra.mxu0 0
    %560 = vmatprep.subr.bf16.mxu0 0
    %561 = vmatpush1.bf16.msra.mxu0 0
    %562 = vmatprep.subr.bf16.mxu0 %v541
    %563 = vmatpush1.bf16.msra.mxu0 %v540
    %564 = vmatprep.subr.bf16.mxu0 %v539
    %565 = vmatpush1.bf16.msra.mxu0 %v538
    %566 = vmatprep.subr.bf16.mxu0 0
    %567 = vmatpush2.bf16.msra.mxu0 0
    %568 = vmatprep.subr.bf16.mxu0 0
    %569 = vmatpush2.bf16.msra.mxu0 0
    %570 = vmatprep.subr.bf16.mxu0 0
    %571 = vmatpush2.bf16.msra.mxu0 0
    %572 = vmatprep.subr.bf16.mxu0 0
    %573 = vmatpush2.bf16.msra.mxu0 0
    %574 = vmatprep.subr.bf16.mxu0 0
    %575 = vmatpush2.bf16.msra.mxu0 0
    %576 = vmatprep.subr.bf16.mxu0 0
    %577 = vmatpush2.bf16.msra.mxu0 0
    %578 = vmatprep.subr.bf16.mxu0 0
    %579 = vmatpush2.bf16.msra.mxu0 0
    %580 = vmatprep.subr.bf16.mxu0 0
    %581 = vmatpush2.bf16.msra.mxu0 0
    %582 = vmatprep.mubr.bf16.mxu0 0
    %583 = vmatmul.mubr.bf16.gmra.mxu0 %v548
    %v584 = vpop.f32.mrf.mxu0
    %v585 = vadd.f32 %v519, %v584
    %v586 = vpop.f32.mrf.mxu0
    %v587 = vadd.f32 %v523, %v586
    %v588 = vpop.f32.mrf.mxu0
    %v589 = vpop.f32.mrf.mxu0
    %590 = vdwg.mxu0
    %v591 = vmax.f32 %v585, 0.0
    %v592 = vmax.f32 %v587, 0.0
    %v593 = vpack.c.bf16 %v591, %v591
    %v594 = vpack.c.bf16 %v592, %v592
    %v595 = vld [vmem:[%s5] sm:$0xf]
    %v596 = vld [vmem:[%s5 + $0x4] sm:$0xf]
    %v597 = vld [vmem:[%s5 + $0x8] sm:$0xf]
    %v598 = vld [vmem:[%s5 + $0xc] sm:$0xf]
    %v599 = vld [vmem:[%s5 + $0x10] sm:$0xf]
    %v600 = vld [vmem:[%s5 + $0x14] sm:$0xf]
    %v601 = vld [vmem:[%s5 + $0x18] sm:$0xf]
    %v602 = vld [vmem:[%s5 + $0x1c] sm:$0xf]
    %v603 = vld [vmem:[%s5 + $0x20] sm:$0xf]
    %v604 = vld [vmem:[%s5 + $0x24] sm:$0xf]
    %v605 = vld [vmem:[%s5 + $0x28] sm:$0xf]
    %v606 = vld [vmem:[%s5 + $0x2c] sm:$0xf]
    %v607 = vld [vmem:[%s5 + $0x30] sm:$0xf]
    %v608 = vld [vmem:[%s5 + $0x34] sm:$0xf]
    %v609 = vld [vmem:[%s5 + $0x38] sm:$0xf]
    %v610 = vld [vmem:[%s5 + $0x3c] sm:$0xf]
    %v611 = vld [vmem:[%s5 + $0x40] sm:$0xf]
    %v612 = vld [vmem:[%s5 + $0x44] sm:$0xf]
    %v613 = vld [vmem:[%s5 + $0x48] sm:$0xf]
    %v614 = vld [vmem:[%s5 + $0x4c] sm:$0xf]
    %v615 = vld [vmem:[%s5 + $0x50] sm:$0xf]
    %v616 = vld [vmem:[%s5 + $0x54] sm:$0xf]
    %v617 = vld [vmem:[%s5 + $0x58] sm:$0xf]
    %v618 = vld [vmem:[%s5 + $0x5c] sm:$0xf]
    %v619 = vld [vmem:[%s5 + $0x60] sm:$0xf]
    %v620 = vld [vmem:[%s5 + $0x64] sm:$0xf]
    %v621 = vld [vmem:[%s5 + $0x68] sm:$0xf]
    %v622 = vld [vmem:[%s5 + $0x6c] sm:$0xf]
    %v623 = vld [vmem:[%s5 + $0x70] sm:$0xf]
    %v624 = vld [vmem:[%s5 + $0x74] sm:$0xf]
    %v625 = vld [vmem:[%s5 + $0x78] sm:$0xf]
    %v626 = vld [vmem:[%s5 + $0x7c] sm:$0xf]
    %v627 = vld [vmem:[%s6] sm:$0x1]
    %v629 = vlaneseq
    %v630 = vshrl.u32 %v629, 7
    %v631 = vsub.s32 0, %v630
    %v632 = vrot.slane %v627, %v631
    %v666 = vunpack.c.l.b16 %v595
    %v667 = vunpack.c.l.b16 %v596
    %v668 = vunpack.c.l.b16 %v597
    %v669 = vunpack.c.l.b16 %v598
    %v670 = vunpack.c.l.b16 %v599
    %v671 = vunpack.c.l.b16 %v600
    %v672 = vunpack.c.l.b16 %v601
    %v673 = vunpack.c.l.b16 %v602
    %v674 = vunpack.c.l.b16 %v603
    %v675 = vunpack.c.l.b16 %v604
    %v676 = vunpack.c.l.b16 %v605
    %v677 = vunpack.c.l.b16 %v606
    %v678 = vunpack.c.l.b16 %v607
    %v679 = vunpack.c.l.b16 %v608
    %v680 = vunpack.c.l.b16 %v609
    %v681 = vunpack.c.l.b16 %v610
    %v682 = vunpack.c.l.b16 %v611
    %v683 = vunpack.c.l.b16 %v612
    %v684 = vunpack.c.l.b16 %v613
    %v685 = vunpack.c.l.b16 %v614
    %v686 = vunpack.c.l.b16 %v615
    %v687 = vunpack.c.l.b16 %v616
    %v688 = vunpack.c.l.b16 %v617
    %v689 = vunpack.c.l.b16 %v618
    %v690 = vunpack.c.l.b16 %v619
    %v691 = vunpack.c.l.b16 %v620
    %v692 = vunpack.c.l.b16 %v621
    %v693 = vunpack.c.l.b16 %v622
    %v694 = vunpack.c.l.b16 %v623
    %v695 = vunpack.c.l.b16 %v624
    %v696 = vunpack.c.l.b16 %v625
    %v697 = vunpack.c.l.b16 %v626
    %v698 = vpack.c.b16 %v667, %v666
    %v699 = vpack.c.b16 %v669, %v668
    %v700 = vpack.c.b16 %v671, %v670
    %v701 = vpack.c.b16 %v673, %v672
    %v702 = vpack.c.b16 %v675, %v674
    %v703 = vpack.c.b16 %v677, %v676
    %v704 = vpack.c.b16 %v679, %v678
    %v705 = vpack.c.b16 %v681, %v680
    %v706 = vpack.c.b16 %v683, %v682
    %v707 = vpack.c.b16 %v685, %v684
    %v708 = vpack.c.b16 %v687, %v686
    %v709 = vpack.c.b16 %v689, %v688
    %v710 = vpack.c.b16 %v691, %v690
    %v711 = vpack.c.b16 %v693, %v692
    %v712 = vpack.c.b16 %v695, %v694
    %v713 = vpack.c.b16 %v697, %v696
    %730 = vmatprep.subr.bf16.mxu0 0
    %731 = vmatpush1.bf16.msra.mxu0 %v705
    %732 = vmatprep.subr.bf16.mxu0 0
    %733 = vmatpush1.bf16.msra.mxu0 %v704
    %734 = vmatprep.subr.bf16.mxu0 0
    %735 = vmatpush1.bf16.msra.mxu0 %v703
    %736 = vmatprep.subr.bf16.mxu0 0
    %737 = vmatpush1.bf16.msra.mxu0 %v702
    %738 = vmatprep.subr.bf16.mxu0 0
    %739 = vmatpush1.bf16.msra.mxu0 %v701
    %740 = vmatprep.subr.bf16.mxu0 0
    %741 = vmatpush1.bf16.msra.mxu0 %v700
    %742 = vmatprep.subr.bf16.mxu0 0
    %743 = vmatpush1.bf16.msra.mxu0 %v699
    %744 = vmatprep.subr.bf16.mxu0 0
    %745 = vmatpush1.bf16.msra.mxu0 %v698
    %746 = vmatprep.subr.bf16.mxu0 0
    %747 = vmatpush2.bf16.msra.mxu0 %v713
    %748 = vmatprep.subr.bf16.mxu0 0
    %749 = vmatpush2.bf16.msra.mxu0 %v712
    %750 = vmatprep.subr.bf16.mxu0 0
    %751 = vmatpush2.bf16.msra.mxu0 %v711
    %752 = vmatprep.subr.bf16.mxu0 0
    %753 = vmatpush2.bf16.msra.mxu0 %v710
    %754 = vmatprep.subr.bf16.mxu0 0
    %755 = vmatpush2.bf16.msra.mxu0 %v709
    %756 = vmatprep.subr.bf16.mxu0 0
    %757 = vmatpush2.bf16.msra.mxu0 %v708
    %758 = vmatprep.subr.bf16.mxu0 0
    %759 = vmatpush2.bf16.msra.mxu0 %v707
    %760 = vmatprep.subr.bf16.mxu0 0
    %761 = vmatpush2.bf16.msra.mxu0 %v706
    %762 = vmatprep.mubr.bf16.mxu0 %v594
    %763 = vmatmul.mubr.bf16.gmra.mxu0 %v593
    %v764 = vpop.f32.mrf.mxu0
    %v765 = vadd.f32 %v632, %v764
    %v766 = vpop.f32.mrf.mxu0
    %v767 = vpop.f32.mrf.mxu0
    %v768 = vpop.f32.mrf.mxu0
    %769 = vdwg.mxu0
    %v770 = vsub.f32 0.0, %v765
    %v771 = vmul.f32 %v770, 1.442695
    %v772 = vpow.pop %v771
    %v773 = vadd.f32 %v772, 1.0
    %v774 = vrcp.pop %v773
    %v775 = vmul.f32 1.0, %v774
    %776 = vst [vmem:[#allocation3] sm:$0x3] %v775
    // Predicated region
    $region30: #{finetune_forward.1} parent=1 // pred_check
      _
    $region31: #{finetune_forward.1} parent=1 // pred_check_branch
      %778 = sbr.rel (0) target = $region33
    $region32: #{finetune_forward.1} parent=1 // pred_region
      %s780 = ssub.s32 32, 32
      %781 = vsyncadd [#allocation4], %s780
      %s783 = sshll.u32 [#allocation3], 4
      %s784 = int_to_ptr.vmem [resolvable:$true] %s783
      %786 = dma.vmem_to_hbm [thread:$0]  %s784, 32, %s7, [#allocation4]
    $region33: #{finetune_forward.1} parent=1 // pred_fallthru
      _
    // Predicated region
    $region34: #{finetune_forward.1} parent=1 // pred_check
      _
    $region35: #{finetune_forward.1} parent=1 // pred_check_branch
      %788 = sbr.rel (0) target = $region37
    $region36: #{finetune_forward.1} parent=1 // pred_region
      %789 = dma.done [#allocation4], 32
    $region37: #{finetune_forward.1} parent=1 // pred_fallthru
      _
    %790 = vsyncpa [#allocation4], 1

</llo_original>
